<compile_context>
chip_gen: v7x
topology: tpu7x:2x2x1
jax: 0.10.0
libtpu: 0.0.40
codegen_flags: <defaults>
</compile_context>

<pallas_src>
import functools
import math

import jax
import jax.numpy as jnp
from jax.experimental import pallas as pl
from jax.experimental.pallas import tpu as pltpu


def mlp_critic_kernel(xT_ref, w1_ref, b1_ref, w2_ref, b2_ref, w3_ref, b3_ref,
                      o_ref, *, matmul_dtype):
    """One batch tile: x^T (obs_dim, TB) -> value row (1, TB)."""
    xT = xT_ref[...]                              # (obs_dim, TB)  f32
    w1 = w1_ref[...]                              # (H1, obs_dim)
    obs_dim = xT_ref.shape[0]                     # static

    # ---- Layer 1: K = obs_dim (tiny) -> VPU broadcast-FMAs, no MXU. ----
    h1 = w1[:, 0:1] * xT[0:1, :]                                  # (H1, TB)
    for k in range(1, obs_dim):                                   # static unroll
        h1 = h1 + w1[:, k:k + 1] * xT[k:k + 1, :]
    h1 = jnp.tanh(h1 + b1_ref[...])                               # EUP tanh, f32

    # ---- Layer 2: 64x64 contraction -> MXU, f32 accumulation. ----
    h2 = jnp.dot(w2_ref[...].astype(matmul_dtype),
                 h1.astype(matmul_dtype),
                 preferred_element_type=jnp.float32) + b2_ref[...]
    h2 = jnp.tanh(h2)                                             # (H2, TB)

    # ---- Layer 3: N = 1 -> VPU multiply + sublane (XLU) reduction. ----
    v = jnp.sum(h2 * w3_ref[...], axis=0, keepdims=True) + b3_ref[...]  # (1, TB)
    o_ref[...] = v.astype(o_ref.dtype)


def mlp_critic_forward(obs, params, *, tile_b=256, matmul_dtype=jnp.float32):
    """Runs the fused MLP critic kernel; returns values of shape (B,).

    params are in PyTorch layout: W of shape (out, in), b of shape (out,).
    Set matmul_dtype=jnp.bfloat16 on v6e/v7x for the 64x64 MXU layer (dot
    inputs only; activations, biases and tanh stay f32 - safe on v5e too).
    """
    (w1, b1), (w2, b2), (w3, b3) = params
    B, obs_dim = obs.shape
    h1d, h2d = w1.shape[0], w2.shape[0]

    # Pad batch to a multiple of the tile and move batch onto the lane axis.
    b_pad = tile_b * pl.cdiv(B, tile_b)
    obs_t = jnp.pad(obs, ((0, b_pad - B), (0, 0))).T              # (obs_dim, b_pad)

    # Kernel-friendly parameter layouts (2-D, feature axis on sublanes).
    b1c = b1.reshape(h1d, 1)
    b2c = b2.reshape(h2d, 1)
    w3c = w3.reshape(1, h2d).T                                    # (H2, 1)
    b3c = b3.reshape(1, 1)

    def const(shape):
        # Constant index_map: weight/bias block never changes -> stays resident.
        return pl.BlockSpec(shape, lambda i: (0, 0))

    out = pl.pallas_call(
        functools.partial(mlp_critic_kernel, matmul_dtype=matmul_dtype),
        out_shape=jax.ShapeDtypeStruct((1, b_pad), jnp.float32),
        grid=(b_pad // tile_b,),
        in_specs=[
            pl.BlockSpec((obs_dim, tile_b), lambda i: (0, i)),    # pipelined obs tile
            const(w1.shape), const(b1c.shape),
            const(w2.shape), const(b2c.shape),
            const(w3c.shape), const(b3c.shape),
        ],
        out_specs=pl.BlockSpec((1, tile_b), lambda i: (0, i)),    # lane-dense store
        compiler_params=pltpu.CompilerParams(
            dimension_semantics=("parallel",)),                   # shards TCs on v7x
    )(obs_t, w1, b1c, w2, b2c, w3c, b3c)

    # torch.squeeze(v, -1) + drop batch padding.
    return out[0, :B]


def init_linear(key, fan_in, fan_out):
    """Mimics torch.nn.Linear default init; PyTorch layout (out,in)/(out,)."""
    kw, kb = jax.random.split(key)
    bound = 1.0 / math.sqrt(fan_in)
    w = jax.random.uniform(kw, (fan_out, fan_in), jnp.float32, -bound, bound)
    b = jax.random.uniform(kb, (fan_out,), jnp.float32, -bound, bound)
    return w, b


def reference_forward(obs, params):
    (w1, b1), (w2, b2), (w3, b3) = params
    h1 = jnp.tanh(obs @ w1.T + b1)
    h2 = jnp.tanh(h1 @ w2.T + b2)
    return jnp.squeeze(h2 @ w3.T + b3, axis=-1)


if __name__ == "__main__":
    obs_dim = 3
    hidden_sizes = [64, 64]
    batch = 8

    key = jax.random.PRNGKey(0)
    k_obs, k1, k2, k3 = jax.random.split(key, 4)

    obs = jax.random.normal(k_obs, (batch, obs_dim), jnp.float32)

    sizes = [obs_dim] + hidden_sizes + [1]
    params = (
        init_linear(k1, sizes[0], sizes[1]),
        init_linear(k2, sizes[1], sizes[2]),
        init_linear(k3, sizes[2], sizes[3]),
    )

    v = mlp_critic_forward(obs, params)
    jax.block_until_ready(v)

    # Sanity check against a pure-JAX reference of the same math.
    v_ref = reference_forward(obs, params)
    assert v.shape == (batch,), v.shape
    assert jnp.allclose(v, v_ref, atol=1e-5, rtol=1e-4), (v, v_ref)

    print("KERNEL_OK")
</pallas_src>

<mosaic_0001>
module attributes {stable_mosaic.version = 11 : i64} {
  func.func @mlp_critic_kernel(%arg0: i32, %arg1: memref<3x256xf32, #tpu.memory_space<vmem>>, %arg2: memref<64x3xf32, #tpu.memory_space<vmem>>, %arg3: memref<64x1xf32, #tpu.memory_space<vmem>>, %arg4: memref<64x64xf32, #tpu.memory_space<vmem>>, %arg5: memref<64x1xf32, #tpu.memory_space<vmem>>, %arg6: memref<64x1xf32, #tpu.memory_space<vmem>>, %arg7: memref<1x1xf32, #tpu.memory_space<vmem>>, %arg8: memref<1x256xf32, #tpu.memory_space<vmem>>) attributes {dimension_semantics = [#tpu.dimension_semantics<parallel>], iteration_bounds = array<i64: 1>, scalar_prefetch = 0 : i64, scratch_operands = 0 : i64, tpu.core_type = #tpu.core_type<tc>, window_params = [{transform_indices = @transform_0, window_bounds = array<i64: 3, 256>}, {pipeline_mode = #tpu.pipeline_mode<synchronous>, transform_indices = @transform_1, window_bounds = array<i64: 64, 3>}, {pipeline_mode = #tpu.pipeline_mode<synchronous>, transform_indices = @transform_2, window_bounds = array<i64: 64, 1>}, {pipeline_mode = #tpu.pipeline_mode<synchronous>, transform_indices = @transform_3, window_bounds = array<i64: 64, 64>}, {pipeline_mode = #tpu.pipeline_mode<synchronous>, transform_indices = @transform_4, window_bounds = array<i64: 64, 1>}, {pipeline_mode = #tpu.pipeline_mode<synchronous>, transform_indices = @transform_5, window_bounds = array<i64: 64, 1>}, {pipeline_mode = #tpu.pipeline_mode<synchronous>, transform_indices = @transform_6, window_bounds = array<i64: 1, 1>}, {transform_indices = @transform_7, window_bounds = array<i64: 1, 256>}]} {
    %c0 = arith.constant 0 : index
    %c0_0 = arith.constant 0 : index
    %0 = vector.load %arg1[%c0, %c0_0] : memref<3x256xf32, #tpu.memory_space<vmem>>, vector<3x256xf32>
    %c0_1 = arith.constant 0 : index
    %c0_2 = arith.constant 0 : index
    %1 = vector.load %arg2[%c0_1, %c0_2] : memref<64x3xf32, #tpu.memory_space<vmem>>, vector<64x3xf32>
    %2 = vector.extract_strided_slice %1 {offsets = [0, 0], sizes = [64, 1], strides = [1, 1]} : vector<64x3xf32> to vector<64x1xf32>
    %3 = vector.extract_strided_slice %0 {offsets = [0, 0], sizes = [1, 256], strides = [1, 1]} : vector<3x256xf32> to vector<1x256xf32>
    %4 = vector.broadcast %2 : vector<64x1xf32> to vector<64x256xf32>
    %5 = vector.broadcast %3 : vector<1x256xf32> to vector<64x256xf32>
    %6 = arith.mulf %4, %5 : vector<64x256xf32>
    %7 = vector.extract_strided_slice %1 {offsets = [0, 1], sizes = [64, 1], strides = [1, 1]} : vector<64x3xf32> to vector<64x1xf32>
    %8 = vector.extract_strided_slice %0 {offsets = [1, 0], sizes = [1, 256], strides = [1, 1]} : vector<3x256xf32> to vector<1x256xf32>
    %9 = vector.broadcast %7 : vector<64x1xf32> to vector<64x256xf32>
    %10 = vector.broadcast %8 : vector<1x256xf32> to vector<64x256xf32>
    %11 = arith.mulf %9, %10 : vector<64x256xf32>
    %12 = arith.addf %6, %11 : vector<64x256xf32>
    %13 = vector.extract_strided_slice %1 {offsets = [0, 2], sizes = [64, 1], strides = [1, 1]} : vector<64x3xf32> to vector<64x1xf32>
    %14 = vector.extract_strided_slice %0 {offsets = [2, 0], sizes = [1, 256], strides = [1, 1]} : vector<3x256xf32> to vector<1x256xf32>
    %15 = vector.broadcast %13 : vector<64x1xf32> to vector<64x256xf32>
    %16 = vector.broadcast %14 : vector<1x256xf32> to vector<64x256xf32>
    %17 = arith.mulf %15, %16 : vector<64x256xf32>
    %18 = arith.addf %12, %17 : vector<64x256xf32>
    %c0_3 = arith.constant 0 : index
    %c0_4 = arith.constant 0 : index
    %19 = vector.load %arg3[%c0_3, %c0_4] : memref<64x1xf32, #tpu.memory_space<vmem>>, vector<64x1xf32>
    %20 = vector.broadcast %19 : vector<64x1xf32> to vector<64x256xf32>
    %21 = arith.addf %18, %20 : vector<64x256xf32>
    %22 = math.tanh %21 : vector<64x256xf32>
    %c0_5 = arith.constant 0 : index
    %c0_6 = arith.constant 0 : index
    %23 = vector.load %arg4[%c0_5, %c0_6] : memref<64x64xf32, #tpu.memory_space<vmem>>, vector<64x64xf32>
    %cst = arith.constant dense<0.000000e+00> : vector<64x256xf32>
    %24 = tpu.matmul %23, %22, %cst {dimension_numbers = #tpu.dot_dimension_numbers<[1], [0], [0], [1], [0, 0, 1, 1], [], []>} : vector<64x64xf32>, vector<64x256xf32>, vector<64x256xf32> -> vector<64x256xf32>
    %c0_7 = arith.constant 0 : index
    %c0_8 = arith.constant 0 : index
    %25 = vector.load %arg5[%c0_7, %c0_8] : memref<64x1xf32, #tpu.memory_space<vmem>>, vector<64x1xf32>
    %26 = vector.broadcast %25 : vector<64x1xf32> to vector<64x256xf32>
    %27 = arith.addf %24, %26 : vector<64x256xf32>
    %28 = math.tanh %27 : vector<64x256xf32>
    %c0_9 = arith.constant 0 : index
    %c0_10 = arith.constant 0 : index
    %29 = vector.load %arg6[%c0_9, %c0_10] : memref<64x1xf32, #tpu.memory_space<vmem>>, vector<64x1xf32>
    %30 = vector.broadcast %29 : vector<64x1xf32> to vector<64x256xf32>
    %31 = arith.mulf %28, %30 : vector<64x256xf32>
    %cst_11 = arith.constant dense<0.000000e+00> : vector<256xf32>
    %32 = vector.multi_reduction <add>, %31, %cst_11 [0] : vector<64x256xf32> to vector<256xf32>
    %33 = vector.shape_cast %32 : vector<256xf32> to vector<1x256xf32>
    %c0_12 = arith.constant 0 : index
    %c0_13 = arith.constant 0 : index
    %34 = vector.load %arg7[%c0_12, %c0_13] : memref<1x1xf32, #tpu.memory_space<vmem>>, vector<1x1xf32>
    %35 = vector.broadcast %34 : vector<1x1xf32> to vector<1x256xf32>
    %36 = arith.addf %33, %35 : vector<1x256xf32>
    %c0_14 = arith.constant 0 : index
    %c0_15 = arith.constant 0 : index
    %37 = vector.load %arg8[%c0_14, %c0_15] : memref<1x256xf32, #tpu.memory_space<vmem>>, vector<1x256xf32>
    tpu.vector_store %arg8[%c0_14, %c0_15], %36 {strides = array<i32>} : memref<1x256xf32, #tpu.memory_space<vmem>>, vector<1x256xf32>,
    return
  }
  func.func @transform_0(%arg0: i32) -> (i32, i32) {
    %c0_i32 = arith.constant 0 : i32
    %c0_i32_0 = arith.constant 0 : i32
    return %c0_i32, %arg0 : i32, i32
  }
  func.func @transform_1(%arg0: i32) -> (i32, i32) {
    %c0_i32 = arith.constant 0 : i32
    %c0_i32_0 = arith.constant 0 : i32
    %c0_i32_1 = arith.constant 0 : i32
    return %c0_i32, %c0_i32_0 : i32, i32
  }
  func.func @transform_2(%arg0: i32) -> (i32, i32) {
    %c0_i32 = arith.constant 0 : i32
    %c0_i32_0 = arith.constant 0 : i32
    %c0_i32_1 = arith.constant 0 : i32
    return %c0_i32, %c0_i32_0 : i32, i32
  }
  func.func @transform_3(%arg0: i32) -> (i32, i32) {
    %c0_i32 = arith.constant 0 : i32
    %c0_i32_0 = arith.constant 0 : i32
    %c0_i32_1 = arith.constant 0 : i32
    return %c0_i32, %c0_i32_0 : i32, i32
  }
  func.func @transform_4(%arg0: i32) -> (i32, i32) {
    %c0_i32 = arith.constant 0 : i32
    %c0_i32_0 = arith.constant 0 : i32
    %c0_i32_1 = arith.constant 0 : i32
    return %c0_i32, %c0_i32_0 : i32, i32
  }
  func.func @transform_5(%arg0: i32) -> (i32, i32) {
    %c0_i32 = arith.constant 0 : i32
    %c0_i32_0 = arith.constant 0 : i32
    %c0_i32_1 = arith.constant 0 : i32
    return %c0_i32, %c0_i32_0 : i32, i32
  }
  func.func @transform_6(%arg0: i32) -> (i32, i32) {
    %c0_i32 = arith.constant 0 : i32
    %c0_i32_0 = arith.constant 0 : i32
    %c0_i32_1 = arith.constant 0 : i32
    return %c0_i32, %c0_i32_0 : i32, i32
  }
  func.func @transform_7(%arg0: i32) -> (i32, i32) {
    %c0_i32 = arith.constant 0 : i32
    %c0_i32_0 = arith.constant 0 : i32
    return %c0_i32, %arg0 : i32, i32
  }
}

</mosaic_0001>

<llo_original>
// kernel: tpu_custom_call.1
$region0: #{tpu_custom_call.1}
  #allocation0 [shape = 'u32[]', space=smem, size = 0x4, offset = 0x4, fixed_abs, tag = 'smem constant byte address 0x4 - core index']
  #allocation1 [shape = 'u32[144,128]{1,0:T(1,128)}', space=vmem, size = 0x12000, scoped, tag = 'internal scratch']
  #allocation2 [shape = 'f32[1,1]{1,0:T(1,128)S(1)}', space=vmem, size = 0x200, scoped, tag = 'scoped memory for tpu_custom_call.1']
  %s0 = inlined_call_operand.vmem [shape: f32[3,256], index: 0, kind: input, shape index: {}]
  %s1 = inlined_call_operand.vmem [shape: f32[64,3], index: 1, kind: input, shape index: {}]
  %s2 = inlined_call_operand.vmem [shape: f32[64,1], index: 2, kind: input, shape index: {}]
  %s3 = inlined_call_operand.vmem [shape: f32[64,64], index: 3, kind: input, shape index: {}]
  %s4 = inlined_call_operand.vmem [shape: f32[64,1], index: 4, kind: input, shape index: {}]
  %s5 = inlined_call_operand.vmem [shape: f32[64,1], index: 5, kind: input, shape index: {}]
  %s6 = inlined_call_operand.<no memory space> [shape: f32[1,1], index: 6, kind: input, shape index: {}]
  %s7 = inlined_call_operand.hbm [shape: f32[1,256], index: 7, kind: output, shape index: {}]
  %s8 = sld [smem:[#allocation0]]
  $region38: #{tpu_custom_call.1} parent=0
    _
  %s10 = ssub.s32 1, %s8
  %s11 = scalar_select 0, %s10, %s8
  %v12 = vstv %s6
  %13 = vst [vmem:[#allocation2] sm:$0x1] %v12
  $region1: #{tpu_custom_call.1} parent=0
    #allocation3 [shape = 'u8[1024]{0}', space=vmem, size = 0x400, scoped, tag = 'output window, operand 0, single buffered']
    #allocation4 [shape = 's32[1]{0}', space=sflag, size = 0x4, scoped, tag = 'scoped memory for tpu_custom_call.1']
    %14 = vsyncpa [#allocation4], 0
    // Predicated region
    $region2: #{tpu_custom_call.1} parent=1 // pred_check
      _
    $region3: #{tpu_custom_call.1} parent=1 // pred_check_branch
      %16 = sbr.rel (0) target = $region5
    $region4: #{tpu_custom_call.1} parent=1 // pred_region
      _
    $region5: #{tpu_custom_call.1} parent=1 // pred_fallthru
      _
    // Predicated region
    $region6: #{tpu_custom_call.1} parent=1 // pred_check
      _
    $region7: #{tpu_custom_call.1} parent=1 // pred_check_branch
      %18 = sbr.rel (0) target = $region9
    $region8: #{tpu_custom_call.1} parent=1 // pred_region
      _
    $region9: #{tpu_custom_call.1} parent=1 // pred_fallthru
      _
    // Predicated region
    $region10: #{tpu_custom_call.1} parent=1 // pred_check
      _
    $region11: #{tpu_custom_call.1} parent=1 // pred_check_branch
      %20 = sbr.rel (0) target = $region13
    $region12: #{tpu_custom_call.1} parent=1 // pred_region
      _
    $region13: #{tpu_custom_call.1} parent=1 // pred_fallthru
      _
    // Predicated region
    $region14: #{tpu_custom_call.1} parent=1 // pred_check
      _
    $region15: #{tpu_custom_call.1} parent=1 // pred_check_branch
      %22 = sbr.rel (0) target = $region17
    $region16: #{tpu_custom_call.1} parent=1 // pred_region
      _
    $region17: #{tpu_custom_call.1} parent=1 // pred_fallthru
      _
    // Predicated region
    $region18: #{tpu_custom_call.1} parent=1 // pred_check
      _
    $region19: #{tpu_custom_call.1} parent=1 // pred_check_branch
      %24 = sbr.rel (0) target = $region21
    $region20: #{tpu_custom_call.1} parent=1 // pred_region
      _
    $region21: #{tpu_custom_call.1} parent=1 // pred_fallthru
      _
    // Predicated region
    $region22: #{tpu_custom_call.1} parent=1 // pred_check
      _
    $region23: #{tpu_custom_call.1} parent=1 // pred_check_branch
      %26 = sbr.rel (0) target = $region25
    $region24: #{tpu_custom_call.1} parent=1 // pred_region
      _
    $region25: #{tpu_custom_call.1} parent=1 // pred_fallthru
      _
    // Predicated region
    $region26: #{tpu_custom_call.1} parent=1 // pred_check
      _
    $region27: #{tpu_custom_call.1} parent=1 // pred_check_branch
      %28 = sbr.rel (0) target = $region29
    $region28: #{tpu_custom_call.1} parent=1 // pred_region
      _
    $region29: #{tpu_custom_call.1} parent=1 // pred_fallthru
      _
    %v29 = vld [vmem:[%s0] sm:$0x77]
    %v30 = vld [vmem:[%s1] sm:$0xff]
    %v31 = vld [vmem:[%s1 + $0x8] sm:$0xff]
    %v32 = vld [vmem:[%s1 + $0x10] sm:$0xff]
    %v33 = vld [vmem:[%s1 + $0x18] sm:$0xff]
    %v34 = vld [vmem:[%s1 + $0x20] sm:$0xff]
    %v35 = vld [vmem:[%s1 + $0x28] sm:$0xff]
    %v36 = vld [vmem:[%s1 + $0x30] sm:$0xff]
    %v37 = vld [vmem:[%s1 + $0x38] sm:$0xff]
    %39 = vset.pattern.permute.xlu0 0
    %40 = vperm.xlu0 %39, %v30
    %v41 = vpop.permute.xlu0 %40
    %44 = vset.pattern.permute.xlu0 0
    %45 = vperm.xlu0 %44, %v31
    %v46 = vpop.permute.xlu0 %45
    %49 = vset.pattern.permute.xlu0 0
    %50 = vperm.xlu0 %49, %v32
    %v51 = vpop.permute.xlu0 %50
    %54 = vset.pattern.permute.xlu0 0
    %55 = vperm.xlu0 %54, %v33
    %v56 = vpop.permute.xlu0 %55
    %59 = vset.pattern.permute.xlu0 0
    %60 = vperm.xlu0 %59, %v34
    %v61 = vpop.permute.xlu0 %60
    %64 = vset.pattern.permute.xlu0 0
    %65 = vperm.xlu0 %64, %v35
    %v66 = vpop.permute.xlu0 %65
    %69 = vset.pattern.permute.xlu0 0
    %70 = vperm.xlu0 %69, %v36
    %v71 = vpop.permute.xlu0 %70
    %74 = vset.pattern.permute.xlu0 0
    %75 = vperm.xlu0 %74, %v37
    %v76 = vpop.permute.xlu0 %75
    %v79 = vlaneseq
    %v80 = vshrl.u32 %v79, 7
    %v81 = vsub.s32 0, %v80
    %v82 = vrot.slane %v29, %v81
    %v83 = vlaneseq
    %v84 = vshrl.u32 %v83, 7
    %v85 = vsub.s32 4, %v84
    %v86 = vrot.slane %v29, %v85
    %v89 = vlaneseq
    %v90 = vshrl.u32 %v89, 7
    %v91 = vsub.s32 0, %v90
    %v92 = vrot.slane %v82, %v91
    %v93 = vlaneseq
    %v94 = vshrl.u32 %v93, 7
    %v95 = vsub.s32 0, %v94
    %v96 = vrot.slane %v86, %v95
    %v97 = vmul.f32 %v41, %v92
    %v98 = vmul.f32 %v41, %v96
    %v99 = vmul.f32 %v46, %v92
    %v100 = vmul.f32 %v46, %v96
    %v101 = vmul.f32 %v51, %v92
    %v102 = vmul.f32 %v51, %v96
    %v103 = vmul.f32 %v56, %v92
    %v104 = vmul.f32 %v56, %v96
    %v105 = vmul.f32 %v61, %v92
    %v106 = vmul.f32 %v61, %v96
    %v107 = vmul.f32 %v66, %v92
    %v108 = vmul.f32 %v66, %v96
    %v109 = vmul.f32 %v71, %v92
    %v110 = vmul.f32 %v71, %v96
    %v111 = vmul.f32 %v76, %v92
    %v112 = vmul.f32 %v76, %v96
    %113 = vset.pattern.permute.xlu0 1
    %114 = vperm.xlu0 %113, %v30
    %v115 = vpop.permute.xlu0 %114
    %117 = vset.pattern.permute.xlu0 1
    %118 = vperm.xlu0 %117, %v31
    %v119 = vpop.permute.xlu0 %118
    %121 = vset.pattern.permute.xlu0 1
    %122 = vperm.xlu0 %121, %v32
    %v123 = vpop.permute.xlu0 %122
    %125 = vset.pattern.permute.xlu0 1
    %126 = vperm.xlu0 %125, %v33
    %v127 = vpop.permute.xlu0 %126
    %129 = vset.pattern.permute.xlu0 1
    %130 = vperm.xlu0 %129, %v34
    %v131 = vpop.permute.xlu0 %130
    %133 = vset.pattern.permute.xlu0 1
    %134 = vperm.xlu0 %133, %v35
    %v135 = vpop.permute.xlu0 %134
    %137 = vset.pattern.permute.xlu0 1
    %138 = vperm.xlu0 %137, %v36
    %v139 = vpop.permute.xlu0 %138
    %141 = vset.pattern.permute.xlu0 1
    %142 = vperm.xlu0 %141, %v37
    %v143 = vpop.permute.xlu0 %142
    %v145 = vlaneseq
    %v146 = vshrl.u32 %v145, 7
    %v147 = vsub.s32 1, %v146
    %v148 = vrot.slane %v29, %v147
    %v149 = vlaneseq
    %v150 = vshrl.u32 %v149, 7
    %v151 = vsub.s32 5, %v150
    %v152 = vrot.slane %v29, %v151
    %v155 = vlaneseq
    %v156 = vshrl.u32 %v155, 7
    %v157 = vsub.s32 1, %v156
    %v158 = vrot.slane %v148, %v157
    %v159 = vlaneseq
    %v160 = vshrl.u32 %v159, 7
    %v161 = vsub.s32 1, %v160
    %v162 = vrot.slane %v152, %v161
    %v163 = vmul.f32 %v115, %v158
    %v164 = vmul.f32 %v115, %v162
    %v165 = vmul.f32 %v119, %v158
    %v166 = vmul.f32 %v119, %v162
    %v167 = vmul.f32 %v123, %v158
    %v168 = vmul.f32 %v123, %v162
    %v169 = vmul.f32 %v127, %v158
    %v170 = vmul.f32 %v127, %v162
    %v171 = vmul.f32 %v131, %v158
    %v172 = vmul.f32 %v131, %v162
    %v173 = vmul.f32 %v135, %v158
    %v174 = vmul.f32 %v135, %v162
    %v175 = vmul.f32 %v139, %v158
    %v176 = vmul.f32 %v139, %v162
    %v177 = vmul.f32 %v143, %v158
    %v178 = vmul.f32 %v143, %v162
    %v179 = vadd.f32 %v97, %v163
    %v180 = vadd.f32 %v98, %v164
    %v181 = vadd.f32 %v99, %v165
    %v182 = vadd.f32 %v100, %v166
    %v183 = vadd.f32 %v101, %v167
    %v184 = vadd.f32 %v102, %v168
    %v185 = vadd.f32 %v103, %v169
    %v186 = vadd.f32 %v104, %v170
    %v187 = vadd.f32 %v105, %v171
    %v188 = vadd.f32 %v106, %v172
    %v189 = vadd.f32 %v107, %v173
    %v190 = vadd.f32 %v108, %v174
    %v191 = vadd.f32 %v109, %v175
    %v192 = vadd.f32 %v110, %v176
    %v193 = vadd.f32 %v111, %v177
    %v194 = vadd.f32 %v112, %v178
    %195 = vset.pattern.permute.xlu0 2
    %196 = vperm.xlu0 %195, %v30
    %v197 = vpop.permute.xlu0 %196
    %199 = vset.pattern.permute.xlu0 2
    %200 = vperm.xlu0 %199, %v31
    %v201 = vpop.permute.xlu0 %200
    %203 = vset.pattern.permute.xlu0 2
    %204 = vperm.xlu0 %203, %v32
    %v205 = vpop.permute.xlu0 %204
    %207 = vset.pattern.permute.xlu0 2
    %208 = vperm.xlu0 %207, %v33
    %v209 = vpop.permute.xlu0 %208
    %211 = vset.pattern.permute.xlu0 2
    %212 = vperm.xlu0 %211, %v34
    %v213 = vpop.permute.xlu0 %212
    %215 = vset.pattern.permute.xlu0 2
    %216 = vperm.xlu0 %215, %v35
    %v217 = vpop.permute.xlu0 %216
    %219 = vset.pattern.permute.xlu0 2
    %220 = vperm.xlu0 %219, %v36
    %v221 = vpop.permute.xlu0 %220
    %223 = vset.pattern.permute.xlu0 2
    %224 = vperm.xlu0 %223, %v37
    %v225 = vpop.permute.xlu0 %224
    %v227 = vlaneseq
    %v228 = vshrl.u32 %v227, 7
    %v229 = vsub.s32 2, %v228
    %v230 = vrot.slane %v29, %v229
    %v231 = vlaneseq
    %v232 = vshrl.u32 %v231, 7
    %v233 = vsub.s32 6, %v232
    %v234 = vrot.slane %v29, %v233
    %v237 = vlaneseq
    %v238 = vshrl.u32 %v237, 7
    %v239 = vsub.s32 2, %v238
    %v240 = vrot.slane %v230, %v239
    %v241 = vlaneseq
    %v242 = vshrl.u32 %v241, 7
    %v243 = vsub.s32 2, %v242
    %v244 = vrot.slane %v234, %v243
    %v245 = vmul.f32 %v197, %v240
    %v246 = vmul.f32 %v197, %v244
    %v247 = vmul.f32 %v201, %v240
    %v248 = vmul.f32 %v201, %v244
    %v249 = vmul.f32 %v205, %v240
    %v250 = vmul.f32 %v205, %v244
    %v251 = vmul.f32 %v209, %v240
    %v252 = vmul.f32 %v209, %v244
    %v253 = vmul.f32 %v213, %v240
    %v254 = vmul.f32 %v213, %v244
    %v255 = vmul.f32 %v217, %v240
    %v256 = vmul.f32 %v217, %v244
    %v257 = vmul.f32 %v221, %v240
    %v258 = vmul.f32 %v221, %v244
    %v259 = vmul.f32 %v225, %v240
    %v260 = vmul.f32 %v225, %v244
    %v261 = vadd.f32 %v179, %v245
    %v262 = vadd.f32 %v180, %v246
    %v263 = vadd.f32 %v181, %v247
    %v264 = vadd.f32 %v182, %v248
    %v265 = vadd.f32 %v183, %v249
    %v266 = vadd.f32 %v184, %v250
    %v267 = vadd.f32 %v185, %v251
    %v268 = vadd.f32 %v186, %v252
    %v269 = vadd.f32 %v187, %v253
    %v270 = vadd.f32 %v188, %v254
    %v271 = vadd.f32 %v189, %v255
    %v272 = vadd.f32 %v190, %v256
    %v273 = vadd.f32 %v191, %v257
    %v274 = vadd.f32 %v192, %v258
    %v275 = vadd.f32 %v193, %v259
    %v276 = vadd.f32 %v194, %v260
    %v277 = vld [vmem:[%s2] sm:$0xff]
    %v278 = vld [vmem:[%s2 + $0x8] sm:$0xff]
    %v279 = vld [vmem:[%s2 + $0x10] sm:$0xff]
    %v280 = vld [vmem:[%s2 + $0x18] sm:$0xff]
    %v281 = vld [vmem:[%s2 + $0x20] sm:$0xff]
    %v282 = vld [vmem:[%s2 + $0x28] sm:$0xff]
    %v283 = vld [vmem:[%s2 + $0x30] sm:$0xff]
    %v284 = vld [vmem:[%s2 + $0x38] sm:$0xff]
    %286 = vset.pattern.permute.xlu0 0
    %287 = vperm.xlu0 %286, %v277
    %v288 = vpop.permute.xlu0 %287
    %291 = vset.pattern.permute.xlu0 0
    %292 = vperm.xlu0 %291, %v278
    %v293 = vpop.permute.xlu0 %292
    %296 = vset.pattern.permute.xlu0 0
    %297 = vperm.xlu0 %296, %v279
    %v298 = vpop.permute.xlu0 %297
    %301 = vset.pattern.permute.xlu0 0
    %302 = vperm.xlu0 %301, %v280
    %v303 = vpop.permute.xlu0 %302
    %306 = vset.pattern.permute.xlu0 0
    %307 = vperm.xlu0 %306, %v281
    %v308 = vpop.permute.xlu0 %307
    %311 = vset.pattern.permute.xlu0 0
    %312 = vperm.xlu0 %311, %v282
    %v313 = vpop.permute.xlu0 %312
    %316 = vset.pattern.permute.xlu0 0
    %317 = vperm.xlu0 %316, %v283
    %v318 = vpop.permute.xlu0 %317
    %321 = vset.pattern.permute.xlu0 0
    %322 = vperm.xlu0 %321, %v284
    %v323 = vpop.permute.xlu0 %322
    %v325 = vadd.f32 %v261, %v288
    %v326 = vadd.f32 %v262, %v288
    %v327 = vadd.f32 %v263, %v293
    %v328 = vadd.f32 %v264, %v293
    %v329 = vadd.f32 %v265, %v298
    %v330 = vadd.f32 %v266, %v298
    %v331 = vadd.f32 %v267, %v303
    %v332 = vadd.f32 %v268, %v303
    %v333 = vadd.f32 %v269, %v308
    %v334 = vadd.f32 %v270, %v308
    %v335 = vadd.f32 %v271, %v313
    %v336 = vadd.f32 %v272, %v313
    %v337 = vadd.f32 %v273, %v318
    %v338 = vadd.f32 %v274, %v318
    %v339 = vadd.f32 %v275, %v323
    %v340 = vadd.f32 %v276, %v323
    %v341 = vtanh.pop %v325
    %v342 = vtanh.pop %v326
    %v343 = vtanh.pop %v327
    %v344 = vtanh.pop %v328
    %v345 = vtanh.pop %v329
    %v346 = vtanh.pop %v330
    %v347 = vtanh.pop %v331
    %v348 = vtanh.pop %v332
    %v349 = vtanh.pop %v333
    %v350 = vtanh.pop %v334
    %v351 = vtanh.pop %v335
    %v352 = vtanh.pop %v336
    %v353 = vtanh.pop %v337
    %v354 = vtanh.pop %v338
    %v355 = vtanh.pop %v339
    %v356 = vtanh.pop %v340
    %v357 = vld [vmem:[%s3] sm:$0xff]
    %v358 = vld [vmem:[%s3 + $0x8] sm:$0xff]
    %v359 = vld [vmem:[%s3 + $0x10] sm:$0xff]
    %v360 = vld [vmem:[%s3 + $0x18] sm:$0xff]
    %v361 = vld [vmem:[%s3 + $0x20] sm:$0xff]
    %v362 = vld [vmem:[%s3 + $0x28] sm:$0xff]
    %v363 = vld [vmem:[%s3 + $0x30] sm:$0xff]
    %v364 = vld [vmem:[%s3 + $0x38] sm:$0xff]
    %v365 = vld [vmem:[%s4] sm:$0xff]
    %v366 = vld [vmem:[%s4 + $0x8] sm:$0xff]
    %v367 = vld [vmem:[%s4 + $0x10] sm:$0xff]
    %v368 = vld [vmem:[%s4 + $0x18] sm:$0xff]
    %v369 = vld [vmem:[%s4 + $0x20] sm:$0xff]
    %v370 = vld [vmem:[%s4 + $0x28] sm:$0xff]
    %v371 = vld [vmem:[%s4 + $0x30] sm:$0xff]
    %v372 = vld [vmem:[%s4 + $0x38] sm:$0xff]
    %374 = vset.pattern.permute.xlu0 0
    %375 = vperm.xlu0 %374, %v365
    %v376 = vpop.permute.xlu0 %375
    %379 = vset.pattern.permute.xlu0 0
    %380 = vperm.xlu0 %379, %v366
    %v381 = vpop.permute.xlu0 %380
    %384 = vset.pattern.permute.xlu0 0
    %385 = vperm.xlu0 %384, %v367
    %v386 = vpop.permute.xlu0 %385
    %389 = vset.pattern.permute.xlu0 0
    %390 = vperm.xlu0 %389, %v368
    %v391 = vpop.permute.xlu0 %390
    %394 = vset.pattern.permute.xlu0 0
    %395 = vperm.xlu0 %394, %v369
    %v396 = vpop.permute.xlu0 %395
    %399 = vset.pattern.permute.xlu0 0
    %400 = vperm.xlu0 %399, %v370
    %v401 = vpop.permute.xlu0 %400
    %404 = vset.pattern.permute.xlu0 0
    %405 = vperm.xlu0 %404, %v371
    %v406 = vpop.permute.xlu0 %405
    %409 = vset.pattern.permute.xlu0 0
    %410 = vperm.xlu0 %409, %v372
    %v411 = vpop.permute.xlu0 %410
    %vm413 = vcmask 523264
    %v415 = vsel %vm413, %v357, 0
    %v418 = vsel %vm413, %v358, 0
    %v421 = vsel %vm413, %v359, 0
    %v424 = vsel %vm413, %v360, 0
    %v427 = vsel %vm413, %v361, 0
    %v430 = vsel %vm413, %v362, 0
    %v433 = vsel %vm413, %v363, 0
    %v436 = vsel %vm413, %v364, 0
    %438 = vmatprep.subr.mxu0 %v342
    %439 = vmatpush1.msra.mxu0 %v341
    %440 = vmatprep.subr.mxu0 %v344
    %441 = vmatpush1.msra.mxu0 %v343
    %442 = vmatprep.subr.mxu0 %v346
    %443 = vmatpush1.msra.mxu0 %v345
    %444 = vmatprep.subr.mxu0 %v348
    %445 = vmatpush1.msra.mxu0 %v347
    %446 = vmatprep.subr.mxu0 %v350
    %447 = vmatpush1.msra.mxu0 %v349
    %448 = vmatprep.subr.mxu0 %v352
    %449 = vmatpush1.msra.mxu0 %v351
    %450 = vmatprep.subr.mxu0 %v354
    %451 = vmatpush1.msra.mxu0 %v353
    %452 = vmatprep.subr.mxu0 %v356
    %453 = vmatpush1.msra.mxu0 %v355
    %454 = vmatprep.subr.mxu0 0.0
    %455 = vmatpush1.msra.mxu0 0.0
    %456 = vmatprep.subr.mxu0 0.0
    %457 = vmatpush1.msra.mxu0 0.0
    %458 = vmatprep.subr.mxu0 0.0
    %459 = vmatpush1.msra.mxu0 0.0
    %460 = vmatprep.subr.mxu0 0.0
    %461 = vmatpush1.msra.mxu0 0.0
    %462 = vmatprep.subr.mxu0 0.0
    %463 = vmatpush1.msra.mxu0 0.0
    %464 = vmatprep.subr.mxu0 0.0
    %465 = vmatpush1.msra.mxu0 0.0
    %466 = vmatprep.subr.mxu0 0.0
    %467 = vmatpush1.msra.mxu0 0.0
    %468 = vmatprep.subr.mxu0 0.0
    %469 = vmatpush1.msra.mxu0 0.0
    %470 = vmatprep.subr.mxu0 0.0
    %471 = vmatpush1.msra.mxu0 0.0
    %472 = vmatprep.subr.mxu0 0.0
    %473 = vmatpush1.msra.mxu0 0.0
    %474 = vmatprep.subr.mxu0 0.0
    %475 = vmatpush1.msra.mxu0 0.0
    %476 = vmatprep.subr.mxu0 0.0
    %477 = vmatpush1.msra.mxu0 0.0
    %478 = vmatprep.subr.mxu0 0.0
    %479 = vmatpush1.msra.mxu0 0.0
    %480 = vmatprep.subr.mxu0 0.0
    %481 = vmatpush1.msra.mxu0 0.0
    %482 = vmatprep.subr.mxu0 0.0
    %483 = vmatpush1.msra.mxu0 0.0
    %484 = vmatprep.subr.mxu0 0.0
    %485 = vmatpush1.msra.mxu0 0.0
    %486 = vmatprep.subr.mxu0 0.0
    %487 = vmatpush1.msra.mxu0 0.0
    %488 = vmatprep.subr.mxu0 0.0
    %489 = vmatpush1.msra.mxu0 0.0
    %490 = vmatprep.subr.mxu0 0.0
    %491 = vmatpush1.msra.mxu0 0.0
    %492 = vmatprep.subr.mxu0 0.0
    %493 = vmatpush1.msra.mxu0 0.0
    %494 = vmatprep.subr.mxu0 0.0
    %495 = vmatpush1.msra.mxu0 0.0
    %496 = vmatprep.subr.mxu0 0.0
    %497 = vmatpush1.msra.mxu0 0.0
    %498 = vmatprep.subr.mxu0 0.0
    %499 = vmatpush1.msra.mxu0 0.0
    %500 = vmatprep.subr.mxu0 0.0
    %501 = vmatpush1.msra.mxu0 0.0
    %502 = vmatprep.mubr.f32.mxu0 0.0
    %503 = vmatmul.mubr.f32.gmra.mrb[0].mxu0 %v415
    %v504 = vpop.f32.mrb[0].mxu0
    %v505 = vadd.f32 %v376, %v504
    %v506 = vpop.f32.mrb[0].mxu0
    %v507 = vadd.f32 %v376, %v506
    %508 = vmatprep.mubr.f32.mxu0 0.0
    %509 = vmatmul.mubr.f32.gmra.mrb[0].mxu0 %v418
    %v510 = vpop.f32.mrb[0].mxu0
    %v511 = vadd.f32 %v381, %v510
    %v512 = vpop.f32.mrb[0].mxu0
    %v513 = vadd.f32 %v381, %v512
    %514 = vmatprep.mubr.f32.mxu0 0.0
    %515 = vmatmul.mubr.f32.gmra.mrb[0].mxu0 %v421
    %v516 = vpop.f32.mrb[0].mxu0
    %v517 = vadd.f32 %v386, %v516
    %v518 = vpop.f32.mrb[0].mxu0
    %v519 = vadd.f32 %v386, %v518
    %520 = vmatprep.mubr.f32.mxu0 0.0
    %521 = vmatmul.mubr.f32.gmra.mrb[0].mxu0 %v424
    %v522 = vpop.f32.mrb[0].mxu0
    %v523 = vadd.f32 %v391, %v522
    %v524 = vpop.f32.mrb[0].mxu0
    %v525 = vadd.f32 %v391, %v524
    %526 = vmatprep.mubr.f32.mxu0 0.0
    %527 = vmatmul.mubr.f32.gmra.mrb[0].mxu0 %v427
    %v528 = vpop.f32.mrb[0].mxu0
    %v529 = vadd.f32 %v396, %v528
    %v530 = vpop.f32.mrb[0].mxu0
    %v531 = vadd.f32 %v396, %v530
    %532 = vmatprep.mubr.f32.mxu0 0.0
    %533 = vmatmul.mubr.f32.gmra.mrb[0].mxu0 %v430
    %v534 = vpop.f32.mrb[0].mxu0
    %v535 = vadd.f32 %v401, %v534
    %v536 = vpop.f32.mrb[0].mxu0
    %v537 = vadd.f32 %v401, %v536
    %538 = vmatprep.mubr.f32.mxu0 0.0
    %539 = vmatmul.mubr.f32.gmra.mrb[0].mxu0 %v433
    %v540 = vpop.f32.mrb[0].mxu0
    %v541 = vadd.f32 %v406, %v540
    %v542 = vpop.f32.mrb[0].mxu0
    %v543 = vadd.f32 %v406, %v542
    %544 = vmatprep.mubr.f32.mxu0 0.0
    %545 = vmatmul.mubr.f32.gmra.mrb[0].mxu0 %v436
    %v546 = vpop.f32.mrb[0].mxu0
    %v547 = vadd.f32 %v411, %v546
    %v548 = vpop.f32.mrb[0].mxu0
    %v549 = vadd.f32 %v411, %v548
    %550 = vdwg.mxu0
    %v551 = vtanh.pop %v505
    %v552 = vtanh.pop %v507
    %v553 = vtanh.pop %v511
    %v554 = vtanh.pop %v513
    %v555 = vtanh.pop %v517
    %v556 = vtanh.pop %v519
    %v557 = vtanh.pop %v523
    %v558 = vtanh.pop %v525
    %v559 = vtanh.pop %v529
    %v560 = vtanh.pop %v531
    %v561 = vtanh.pop %v535
    %v562 = vtanh.pop %v537
    %v563 = vtanh.pop %v541
    %v564 = vtanh.pop %v543
    %v565 = vtanh.pop %v547
    %v566 = vtanh.pop %v549
    %v567 = vld [vmem:[%s5] sm:$0xff]
    %v568 = vld [vmem:[%s5 + $0x8] sm:$0xff]
    %v569 = vld [vmem:[%s5 + $0x10] sm:$0xff]
    %v570 = vld [vmem:[%s5 + $0x18] sm:$0xff]
    %v571 = vld [vmem:[%s5 + $0x20] sm:$0xff]
    %v572 = vld [vmem:[%s5 + $0x28] sm:$0xff]
    %v573 = vld [vmem:[%s5 + $0x30] sm:$0xff]
    %v574 = vld [vmem:[%s5 + $0x38] sm:$0xff]
    %576 = vset.pattern.permute.xlu0 0
    %577 = vperm.xlu0 %576, %v567
    %v578 = vpop.permute.xlu0 %577
    %581 = vset.pattern.permute.xlu0 0
    %582 = vperm.xlu0 %581, %v568
    %v583 = vpop.permute.xlu0 %582
    %586 = vset.pattern.permute.xlu0 0
    %587 = vperm.xlu0 %586, %v569
    %v588 = vpop.permute.xlu0 %587
    %591 = vset.pattern.permute.xlu0 0
    %592 = vperm.xlu0 %591, %v570
    %v593 = vpop.permute.xlu0 %592
    %596 = vset.pattern.permute.xlu0 0
    %597 = vperm.xlu0 %596, %v571
    %v598 = vpop.permute.xlu0 %597
    %601 = vset.pattern.permute.xlu0 0
    %602 = vperm.xlu0 %601, %v572
    %v603 = vpop.permute.xlu0 %602
    %606 = vset.pattern.permute.xlu0 0
    %607 = vperm.xlu0 %606, %v573
    %v608 = vpop.permute.xlu0 %607
    %611 = vset.pattern.permute.xlu0 0
    %612 = vperm.xlu0 %611, %v574
    %v613 = vpop.permute.xlu0 %612
    %v615 = vmul.f32 %v551, %v578
    %v616 = vmul.f32 %v552, %v578
    %v617 = vmul.f32 %v553, %v583
    %v618 = vmul.f32 %v554, %v583
    %v619 = vmul.f32 %v555, %v588
    %v620 = vmul.f32 %v556, %v588
    %v621 = vmul.f32 %v557, %v593
    %v622 = vmul.f32 %v558, %v593
    %v623 = vmul.f32 %v559, %v598
    %v624 = vmul.f32 %v560, %v598
    %v625 = vmul.f32 %v561, %v603
    %v626 = vmul.f32 %v562, %v603
    %v627 = vmul.f32 %v563, %v608
    %v628 = vmul.f32 %v564, %v608
    %v629 = vmul.f32 %v565, %v613
    %v630 = vmul.f32 %v566, %v613
    %v631 = vadd.f32 %v615, %v617
    %v632 = vadd.f32 %v631, %v619
    %v633 = vadd.f32 %v632, %v621
    %v634 = vadd.f32 %v633, %v623
    %v635 = vadd.f32 %v634, %v625
    %v636 = vadd.f32 %v635, %v627
    %v637 = vadd.f32 %v636, %v629
    %v638 = vrot.slane %v637, 4
    %v639 = vadd.f32 %v637, %v638
    %v640 = vrot.slane %v639, 2
    %v641 = vadd.f32 %v639, %v640
    %v642 = vrot.slane %v641, 1
    %v643 = vadd.f32 %v641, %v642
    %v644 = vadd.f32 %v616, %v618
    %v645 = vadd.f32 %v644, %v620
    %v646 = vadd.f32 %v645, %v622
    %v647 = vadd.f32 %v646, %v624
    %v648 = vadd.f32 %v647, %v626
    %v649 = vadd.f32 %v648, %v628
    %v650 = vadd.f32 %v649, %v630
    %v651 = vrot.slane %v650, 4
    %v652 = vadd.f32 %v650, %v651
    %v653 = vrot.slane %v652, 2
    %v654 = vadd.f32 %v652, %v653
    %v655 = vrot.slane %v654, 1
    %v656 = vadd.f32 %v654, %v655
    %v657 = vld [vmem:[#allocation2] sm:$0x1]
    %659 = vset.pattern.permute.xlu0 0
    %660 = vperm.xlu0 %659, %v657
    %v661 = vpop.permute.xlu0 %660
    %v663 = vlaneseq
    %v664 = vshrl.u32 %v663, 7
    %v665 = vsub.s32 0, %v664
    %v666 = vrot.slane %v661, %v665
    %v667 = vadd.f32 %v643, %v666
    %v668 = vadd.f32 %v656, %v666
    %v671 = vcombine.low %v667, %v668
    %v673 = vunpack.c.l.s4 1966171168
    %v674 = vunpack.c.0.s8 %v673
    %v675 = vlaneseq
    %v676 = vshrl.u32 %v675, 7
    %v677 = vsub.s32 %v674, %v676
    %v678 = vrot.slane %v671, %v677
    %v680 = vunpack.c.l.s4 1966171168
    %v681 = vunpack.c.0.s8 %v680
    %v682 = vlaneseq
    %v683 = vshrl.u32 %v682, 7
    %v684 = vsub.s32 %v681, %v683
    %v685 = vrot.slane %v678, %v684
    %v687 = vlaneseq
    %vm688 = vcmp.ge.s32.totalorder %v687, 0
    %vm689 = vcmp.lt.s32.totalorder %v687, 256
    %vm690 = vmand %vm688, %vm689
    %691 = vst.msk [vmem:[#allocation3] sm:$0x3] %vm690, %v685
    // Predicated region
    $region30: #{tpu_custom_call.1} parent=1 // pred_check
      _
    $region31: #{tpu_custom_call.1} parent=1 // pred_check_branch
      %693 = sbr.rel (0) target = $region33
    $region32: #{tpu_custom_call.1} parent=1 // pred_region
      %s695 = ssub.s32 32, 32
      %696 = vsyncadd [#allocation4], %s695
      %s698 = sshll.u32 [#allocation3], 4
      %s699 = int_to_ptr.vmem [resolvable:$true] %s698
      %701 = dma.vmem_to_hbm [thread:$0]  %s699, 32, %s7, [#allocation4]
    $region33: #{tpu_custom_call.1} parent=1 // pred_fallthru
      _
    // Predicated region
    $region34: #{tpu_custom_call.1} parent=1 // pred_check
      _
    $region35: #{tpu_custom_call.1} parent=1 // pred_check_branch
      %703 = sbr.rel (0) target = $region37
    $region36: #{tpu_custom_call.1} parent=1 // pred_region
      %704 = dma.done [#allocation4], 32
    $region37: #{tpu_custom_call.1} parent=1 // pred_fallthru
      _
    %705 = vsyncpa [#allocation4], 1

</llo_original>
